<compile_context>
chip_gen: v6e
topology: v6e:2x2x1
jax: 0.10.0
libtpu: 0.0.40
codegen_flags: <defaults>
</compile_context>

<pallas_src>
import functools

import jax
import jax.numpy as jnp
from jax.experimental import pallas as pl
from jax.experimental.pallas import tpu as pltpu


def _round_up(x, m):
    return ((x + m - 1) // m) * m


def _round_down_min(x, m):
    return max(m, (x // m) * m)


# ---------------------------------------------------------------------------
# Path 1: VMEM-resident table + one-hot gather on the MXU (small tables).
# ---------------------------------------------------------------------------
def _onehot_gather_kernel(idx_ref, table_ref, out_ref):
    # idx_ref:   (block_rows, 1) int32 VMEM -- already normalized & clamped
    # table_ref: (vocab_pad, dim) VMEM      -- resident (constant index_map)
    # out_ref:   (block_rows, dim) VMEM output tile
    block_rows = idx_ref.shape[0]
    vocab_pad = table_ref.shape[0]

    idx = idx_ref[...]                                                # (bR, 1)
    cols = jax.lax.broadcasted_iota(jnp.int32, (block_rows, vocab_pad), 1)
    one_hot = (cols == idx).astype(table_ref.dtype)                   # (bR, Vp)
    out_ref[...] = jnp.dot(
        one_hot, table_ref[...], preferred_element_type=jnp.float32
    ).astype(out_ref.dtype)


def _embedding_onehot(norm_idx, table, *, block_rows=None):
    n = norm_idx.shape[0]
    vocab, dim = table.shape
    itemsize = jnp.dtype(table.dtype).itemsize

    # Pad vocab to a lane-dense multiple of 128 (zero rows, never selected
    # because indices are clamped to [0, vocab-1]).  In a real module this
    # padding would be done once at init, not per call.
    vocab_pad = _round_up(vocab, 128)
    if vocab_pad != vocab:
        table = jnp.pad(table, ((0, vocab_pad - vocab), (0, 0)))

    if block_rows is None:
        # Keep the (block_rows, vocab_pad) f32 one-hot operand <= ~8 MiB.
        budget_rows = (8 * 1024 * 1024) // (vocab_pad * 4)
        block_rows = min(512, _round_down_min(budget_rows, 8), _round_up(n, 8))
        block_rows = max(8, block_rows)

    n_padded = _round_up(n, block_rows)
    if n_padded != n:
        norm_idx = jnp.pad(norm_idx, (0, n_padded - n))  # row 0; sliced off below
    idx2d = norm_idx.reshape(n_padded, 1)

    # Explicit, conservative VMEM budget (keeps v7x's 64 MiB comfortable).
    vmem_est = (2 * vocab_pad * dim * itemsize        # resident table (x2 worst case)
                + block_rows * vocab_pad * 4          # one-hot operand
                + 2 * block_rows * dim * itemsize     # double-buffered out tile
                + 2 * block_rows * 4)                 # index blocks
    vmem_limit = int(min(48 * 1024 * 1024, max(16 * 1024 * 1024, 2 * vmem_est)))

    out = pl.pallas_call(
        _onehot_gather_kernel,
        out_shape=jax.ShapeDtypeStruct((n_padded, dim), table.dtype),
        grid_spec=pltpu.PrefetchScalarGridSpec(
            num_scalar_prefetch=0,
            grid=(n_padded // block_rows,),
            in_specs=[
                pl.BlockSpec((block_rows, 1), lambda i: (i, 0)),
                pl.BlockSpec((vocab_pad, dim), lambda i: (0, 0)),   # resident table
            ],
            out_specs=pl.BlockSpec((block_rows, dim), lambda i: (i, 0)),
        ),
        compiler_params=pltpu.CompilerParams(
            dimension_semantics=("parallel",),
            vmem_limit_bytes=vmem_limit,
        ),
    )(idx2d, table)
    return out[:n]


# ---------------------------------------------------------------------------
# Path 2: HBM-resident table, per-row DMA gather with a rolling window.
# ---------------------------------------------------------------------------
def _dma_gather_kernel(idx_ref, table_hbm, out_ref, sem, *, block_rows, window):
    # idx_ref:   (n_padded,) int32 SMEM (scalar prefetch), normalized & clamped
    # table_hbm: (vocab, dim) in HBM (memory_space=pl.ANY) -- never fully copied
    # out_ref:   (block_rows, dim) VMEM output tile
    # sem:       (window,) DMA semaphores, reused round-robin
    base = pl.program_id(0) * block_rows

    def start(r):
        row = idx_ref[base + r]            # plain SMEM load; no index math here
        pltpu.make_async_copy(
            table_hbm.at[pl.ds(row, 1), :],
            out_ref.at[pl.ds(r, 1), :],
            sem.at[r & (window - 1)],
        ).start()

    def drain(r):
        # Source index is irrelevant for .wait(); only the semaphore and the
        # transfer size (one (1, dim) row) matter.
        pltpu.make_async_copy(
            table_hbm.at[pl.ds(0, 1), :],
            out_ref.at[pl.ds(r, 1), :],
            sem.at[r & (window - 1)],
        ).wait()

    # Prime the rolling window (static unroll; `window` is small).
    for r in range(window):
        start(r)

    def body(r, carry):
        drain(r)                                   # wait oldest ...

        @pl.when(r + window < block_rows)
        def _():
            start(r + window)                      # ... while issuing the next

        return carry

    jax.lax.fori_loop(0, block_rows, body, 0)


def _embedding_dma(norm_idx, table, *, block_rows=None, window=32):
    n = norm_idx.shape[0]
    vocab, dim = table.shape
    itemsize = jnp.dtype(table.dtype).itemsize

    if block_rows is None:
        # Double-buffered output tile 2*block_rows*dim*itemsize <= ~8 MiB,
        # capped at 512 rows/step; fits easily in v7x's 64 MiB VMEM.
        budget_rows = (4 * 1024 * 1024) // (dim * itemsize)
        block_rows = min(512, _round_down_min(budget_rows, 8), _round_up(n, 8))
        block_rows = max(8, block_rows)

    # Rolling DMA window: power of two (cheap `&` slot math), <= block_rows.
    while window > block_rows:
        window //= 2

    n_padded = _round_up(n, block_rows)
    if n_padded != n:
        norm_idx = jnp.pad(norm_idx, (0, n_padded - n))  # row 0; sliced off below

    vmem_limit = int(min(48 * 1024 * 1024,
                         max(16 * 1024 * 1024, 4 * block_rows * dim * itemsize)))

    # TODO(synk): for multi-million-token batches, feed indices per grid step
    # via an SMEM BlockSpec window instead of scalar-prefetching the whole
    # array (1-D SMEM arrays pad to next_pow2(4N) bytes and SMEM is small).
    out = pl.pallas_call(
        functools.partial(_dma_gather_kernel, block_rows=block_rows, window=window),
        out_shape=jax.ShapeDtypeStruct((n_padded, dim), table.dtype),
        grid_spec=pltpu.PrefetchScalarGridSpec(
            num_scalar_prefetch=1,                          # indices -> SMEM
            grid=(n_padded // block_rows,),
            in_specs=[pl.BlockSpec(memory_space=pl.ANY)],   # table stays in HBM
            out_specs=pl.BlockSpec((block_rows, dim), lambda i, idx: (i, 0)),
            scratch_shapes=[pltpu.SemaphoreType.DMA((window,))],
        ),
        compiler_params=pltpu.CompilerParams(
            dimension_semantics=("parallel",),   # 2-TC sharding on v7x
            vmem_limit_bytes=vmem_limit,
        ),
    )(norm_idx, table)
    return out[:n]


# ---------------------------------------------------------------------------
# Public wrapper: Embedding.forward(x) == embed(x - min)
# ---------------------------------------------------------------------------
def embedding_forward(x, table, min_val, *, block_rows=None, path=None):
    orig_shape = x.shape
    vocab, dim = table.shape
    itemsize = jnp.dtype(table.dtype).itemsize

    flat = x.reshape(-1).astype(jnp.int32)
    # Normalize once in the wrapper (single fused int32 elementwise op) so the
    # kernels do zero per-row index arithmetic on the scalar unit.
    # TODO(synk): PyTorch nn.Embedding raises on out-of-range indices; clamping
    # is the closest data-parallel equivalent here.
    norm = jnp.clip(flat - min_val, 0, vocab - 1)

    small_table = _round_up(vocab, 128) * dim * itemsize <= 4 * 1024 * 1024
    use_onehot = small_table if path is None else (path == "onehot")

    if use_onehot:
        out = _embedding_onehot(norm, table, block_rows=block_rows)
    else:
        out = _embedding_dma(norm, table, block_rows=block_rows)
    return out.reshape(orig_shape + (dim,))


if __name__ == "__main__":
    # Synthetic "var" configuration (matches the module __init__ signature):
    #   var.range -> vocabulary size, var.min -> index offset
    VAR_RANGE = 32
    VAR_MIN = -3
    DIM = 32

    key = jax.random.PRNGKey(0)
    k_tab, k_idx, k_tab2, k_idx2 = jax.random.split(key, 4)

    # --- Path 1 (demo config): small table -> VMEM-resident one-hot/MXU path.
    table = jax.random.normal(k_tab, (VAR_RANGE, DIM), dtype=jnp.float32)
    x = jax.random.randint(
        k_idx, (2, 8), minval=VAR_MIN, maxval=VAR_MIN + VAR_RANGE, dtype=jnp.int32
    )
    out = jax.block_until_ready(embedding_forward(x, table, VAR_MIN))
    ref = jnp.take(table, x - VAR_MIN, axis=0)
    assert out.shape == x.shape + (DIM,)
    assert jnp.allclose(out, ref, atol=1e-6), "one-hot path mismatch vs reference"

    # --- Path 2: force the HBM-resident rolling-window DMA gather path.
    V2, D2, MIN2 = 512, 256, 0
    table2 = jax.random.normal(k_tab2, (V2, D2), dtype=jnp.float32)
    x2 = jax.random.randint(
        k_idx2, (8, 160), minval=MIN2, maxval=MIN2 + V2, dtype=jnp.int32
    )
    out2 = jax.block_until_ready(embedding_forward(x2, table2, MIN2, path="dma"))
    ref2 = jnp.take(table2, x2 - MIN2, axis=0)
    assert out2.shape == x2.shape + (D2,)
    assert jnp.allclose(out2, ref2, atol=1e-6), "DMA path mismatch vs reference"

    print("KERNEL_OK")
</pallas_src>

<mosaic_0001>
module attributes {stable_mosaic.version = 11 : i64} {
  func.func @_onehot_gather_kernel(%arg0: i32, %arg1: memref<16x1xi32, #tpu.memory_space<vmem>>, %arg2: memref<128x32xf32, #tpu.memory_space<vmem>>, %arg3: memref<16x32xf32, #tpu.memory_space<vmem>>) attributes {dimension_semantics = [#tpu.dimension_semantics<parallel>], iteration_bounds = array<i64: 1>, scalar_prefetch = 0 : i64, scratch_operands = 0 : i64, tpu.core_type = #tpu.core_type<tc>, window_params = [{transform_indices = @transform_0, window_bounds = array<i64: 16, 1>}, {pipeline_mode = #tpu.pipeline_mode<synchronous>, transform_indices = @transform_1, window_bounds = array<i64: 128, 32>}, {transform_indices = @transform_2, window_bounds = array<i64: 16, 32>}]} {
    %c0 = arith.constant 0 : index
    %c0_0 = arith.constant 0 : index
    %0 = vector.load %arg1[%c0, %c0_0] : memref<16x1xi32, #tpu.memory_space<vmem>>, vector<16x1xi32>
    %1 = tpu.iota {dimensions = array<i32: 1>} : vector<16x128xi32>
    %2 = vector.broadcast %0 : vector<16x1xi32> to vector<16x128xi32>
    %3 = arith.cmpi eq, %1, %2 : vector<16x128xi32>
    %4 = arith.extui %3 : vector<16x128xi1> to vector<16x128xi32>
    %5 = arith.sitofp %4 : vector<16x128xi32> to vector<16x128xf32>
    %c0_1 = arith.constant 0 : index
    %c0_2 = arith.constant 0 : index
    %6 = vector.load %arg2[%c0_1, %c0_2] : memref<128x32xf32, #tpu.memory_space<vmem>>, vector<128x32xf32>
    %cst = arith.constant dense<0.000000e+00> : vector<16x32xf32>
    %7 = tpu.matmul %5, %6, %cst {dimension_numbers = #tpu.dot_dimension_numbers<[1], [0], [0], [1], [0, 0, 1, 1], [], []>} : vector<16x128xf32>, vector<128x32xf32>, vector<16x32xf32> -> vector<16x32xf32>
    %c0_3 = arith.constant 0 : index
    %c0_4 = arith.constant 0 : index
    %8 = vector.load %arg3[%c0_3, %c0_4] : memref<16x32xf32, #tpu.memory_space<vmem>>, vector<16x32xf32>
    tpu.vector_store %arg3[%c0_3, %c0_4], %7 {strides = array<i32>} : memref<16x32xf32, #tpu.memory_space<vmem>>, vector<16x32xf32>,
    return
  }
  func.func @transform_0(%arg0: i32) -> (i32, i32) {
    %c0_i32 = arith.constant 0 : i32
    %c0_i32_0 = arith.constant 0 : i32
    return %arg0, %c0_i32 : i32, i32
  }
  func.func @transform_1(%arg0: i32) -> (i32, i32) {
    %c0_i32 = arith.constant 0 : i32
    %c0_i32_0 = arith.constant 0 : i32
    %c0_i32_1 = arith.constant 0 : i32
    return %c0_i32, %c0_i32_0 : i32, i32
  }
  func.func @transform_2(%arg0: i32) -> (i32, i32) {
    %c0_i32 = arith.constant 0 : i32
    %c0_i32_0 = arith.constant 0 : i32
    return %arg0, %c0_i32 : i32, i32
  }
}

</mosaic_0001>

<llo_original>
// kernel: tpu_custom_call.1
$region0: #{tpu_custom_call.1}
  #allocation0 [shape = 'u32[]', space=smem, size = 0x4, offset = 0x4, fixed_abs, tag = 'smem constant byte address 0x4 - core index']
  #allocation1 [shape = 'u32[144,128]{1,0:T(1,128)}', space=vmem, size = 0x12000, scoped, tag = 'internal scratch']
  %s0 = inlined_call_operand.vmem [shape: s32[16,1], index: 0, kind: input, shape index: {}]
  %s1 = inlined_call_operand.vmem [shape: f32[128,32], index: 1, kind: input, shape index: {}]
  %s2 = inlined_call_operand.hbm [shape: f32[16,32], index: 2, kind: output, shape index: {}]
  %s3 = sld [smem:[#allocation0]]
  $region18: #{tpu_custom_call.1} parent=0
    _
  %s5 = ssub.s32 1, %s3
  %s6 = scalar_select 0, %s5, %s3
  $region1: #{tpu_custom_call.1} parent=0
    #allocation2 [shape = 'u8[8192]{0}', space=vmem, size = 0x2000, scoped, tag = 'output window, operand 0, single buffered']
    #allocation3 [shape = 's32[1]{0}', space=sflag, size = 0x4, scoped, tag = 'scoped memory for tpu_custom_call.1']
    %7 = vsyncpa [#allocation3], 0
    // Predicated region
    $region2: #{tpu_custom_call.1} parent=1 // pred_check
      _
    $region3: #{tpu_custom_call.1} parent=1 // pred_check_branch
      %9 = sbr.rel (0) target = $region5
    $region4: #{tpu_custom_call.1} parent=1 // pred_region
      _
    $region5: #{tpu_custom_call.1} parent=1 // pred_fallthru
      _
    // Predicated region
    $region6: #{tpu_custom_call.1} parent=1 // pred_check
      _
    $region7: #{tpu_custom_call.1} parent=1 // pred_check_branch
      %11 = sbr.rel (0) target = $region9
    $region8: #{tpu_custom_call.1} parent=1 // pred_region
      _
    $region9: #{tpu_custom_call.1} parent=1 // pred_fallthru
      _
    %v12 = vld [vmem:[%s0] sm:$0xff]
    %v13 = vld [vmem:[%s0 + $0x8] sm:$0xff]
    %v14 = vlaneseq
    %v15 = vand.u32 %v14, 127
    %16 = vset.pattern.permute.xlu0 0
    %17 = vperm.xlu0 %16, %v12
    %v18 = vpop.permute.xlu0 %17
    %19 = vset.pattern.permute.xlu0 0
    %20 = vperm.xlu0 %19, %v13
    %v21 = vpop.permute.xlu0 %20
    %vm22 = vcmp.eq.s32.totalorder %v15, %v18
    %vm23 = vcmp.eq.s32.totalorder %v15, %v21
    %v24 = vsel %vm22, 1, 0
    %v25 = vsel %vm23, 1, 0
    %v26 = vcvt.s32.f32 %v24
    %v27 = vcvt.s32.f32 %v25
    %v28 = vld [vmem:[%s1] sm:$0xff]
    %v29 = vld [vmem:[%s1 + $0x8] sm:$0xff]
    %v30 = vld [vmem:[%s1 + $0x10] sm:$0xff]
    %v31 = vld [vmem:[%s1 + $0x18] sm:$0xff]
    %v32 = vld [vmem:[%s1 + $0x20] sm:$0xff]
    %v33 = vld [vmem:[%s1 + $0x28] sm:$0xff]
    %v34 = vld [vmem:[%s1 + $0x30] sm:$0xff]
    %v35 = vld [vmem:[%s1 + $0x38] sm:$0xff]
    %v36 = vld [vmem:[%s1 + $0x40] sm:$0xff]
    %v37 = vld [vmem:[%s1 + $0x48] sm:$0xff]
    %v38 = vld [vmem:[%s1 + $0x50] sm:$0xff]
    %v39 = vld [vmem:[%s1 + $0x58] sm:$0xff]
    %v40 = vld [vmem:[%s1 + $0x60] sm:$0xff]
    %v41 = vld [vmem:[%s1 + $0x68] sm:$0xff]
    %v42 = vld [vmem:[%s1 + $0x70] sm:$0xff]
    %v43 = vld [vmem:[%s1 + $0x78] sm:$0xff]
    %44 = vmatprep.subr.mxu0 0.0
    %45 = vmatpush1.msra.mxu0 %v43
    %46 = vmatprep.subr.mxu0 0.0
    %47 = vmatpush1.msra.mxu0 %v42
    %48 = vmatprep.subr.mxu0 0.0
    %49 = vmatpush1.msra.mxu0 %v41
    %50 = vmatprep.subr.mxu0 0.0
    %51 = vmatpush1.msra.mxu0 %v40
    %52 = vmatprep.subr.mxu0 0.0
    %53 = vmatpush1.msra.mxu0 %v39
    %54 = vmatprep.subr.mxu0 0.0
    %55 = vmatpush1.msra.mxu0 %v38
    %56 = vmatprep.subr.mxu0 0.0
    %57 = vmatpush1.msra.mxu0 %v37
    %58 = vmatprep.subr.mxu0 0.0
    %59 = vmatpush1.msra.mxu0 %v36
    %60 = vmatprep.subr.mxu0 0.0
    %61 = vmatpush1.msra.mxu0 %v35
    %62 = vmatprep.subr.mxu0 0.0
    %63 = vmatpush1.msra.mxu0 %v34
    %64 = vmatprep.subr.mxu0 0.0
    %65 = vmatpush1.msra.mxu0 %v33
    %66 = vmatprep.subr.mxu0 0.0
    %67 = vmatpush1.msra.mxu0 %v32
    %68 = vmatprep.subr.mxu0 0.0
    %69 = vmatpush1.msra.mxu0 %v31
    %70 = vmatprep.subr.mxu0 0.0
    %71 = vmatpush1.msra.mxu0 %v30
    %72 = vmatprep.subr.mxu0 0.0
    %73 = vmatpush1.msra.mxu0 %v29
    %74 = vmatprep.subr.mxu0 0.0
    %75 = vmatpush1.msra.mxu0 %v28
    %76 = vmatprep.subr.mxu0 0.0
    %77 = vmatpush2.msra.mxu0 0.0
    %78 = vmatprep.subr.mxu0 0.0
    %79 = vmatpush2.msra.mxu0 0.0
    %80 = vmatprep.subr.mxu0 0.0
    %81 = vmatpush2.msra.mxu0 0.0
    %82 = vmatprep.subr.mxu0 0.0
    %83 = vmatpush2.msra.mxu0 0.0
    %84 = vmatprep.subr.mxu0 0.0
    %85 = vmatpush2.msra.mxu0 0.0
    %86 = vmatprep.subr.mxu0 0.0
    %87 = vmatpush2.msra.mxu0 0.0
    %88 = vmatprep.subr.mxu0 0.0
    %89 = vmatpush2.msra.mxu0 0.0
    %90 = vmatprep.subr.mxu0 0.0
    %91 = vmatpush2.msra.mxu0 0.0
    %92 = vmatprep.subr.mxu0 0.0
    %93 = vmatpush2.msra.mxu0 0.0
    %94 = vmatprep.subr.mxu0 0.0
    %95 = vmatpush2.msra.mxu0 0.0
    %96 = vmatprep.subr.mxu0 0.0
    %97 = vmatpush2.msra.mxu0 0.0
    %98 = vmatprep.subr.mxu0 0.0
    %99 = vmatpush2.msra.mxu0 0.0
    %100 = vmatprep.subr.mxu0 0.0
    %101 = vmatpush2.msra.mxu0 0.0
    %102 = vmatprep.subr.mxu0 0.0
    %103 = vmatpush2.msra.mxu0 0.0
    %104 = vmatprep.subr.mxu0 0.0
    %105 = vmatpush2.msra.mxu0 0.0
    %106 = vmatprep.subr.mxu0 0.0
    %107 = vmatpush2.msra.mxu0 0.0
    %108 = vmatprep.mubr.f32.mxu0 0.0
    %109 = vmatmul.mubr.f32.gmra.mxu0 %v26
    %v110 = vpop.f32.mrf.mxu0
    %v111 = vadd.f32 0.0, %v110
    %v112 = vpop.f32.mrf.mxu0
    %113 = vmatprep.mubr.f32.mxu0 0.0
    %114 = vmatmul.mubr.f32.gmra.mxu0 %v27
    %v115 = vpop.f32.mrf.mxu0
    %v116 = vadd.f32 0.0, %v115
    %v117 = vpop.f32.mrf.mxu0
    %118 = vdwg.mxu0
    %vm119 = vcmask 261120
    %120 = vst.msk [vmem:[#allocation2] sm:$0xff] %vm119, %v111
    %121 = vst.msk [vmem:[#allocation2 + $0x8] sm:$0xff] %vm119, %v116
    // Predicated region
    $region10: #{tpu_custom_call.1} parent=1 // pred_check
      _
    $region11: #{tpu_custom_call.1} parent=1 // pred_check_branch
      %123 = sbr.rel (0) target = $region13
    $region12: #{tpu_custom_call.1} parent=1 // pred_region
      %s125 = ssub.s32 256, 256
      %126 = vsyncadd [#allocation3], %s125
      %s127 = sshll.u32 [#allocation2], 4
      %s128 = int_to_ptr.vmem [resolvable:$true] %s127
      %133 = dma.vmem_to_hbm [thread:$0]  %s128, 256, %s2, [#allocation3], 128, 128, 8
    $region13: #{tpu_custom_call.1} parent=1 // pred_fallthru
      _
    // Predicated region
    $region14: #{tpu_custom_call.1} parent=1 // pred_check
      _
    $region15: #{tpu_custom_call.1} parent=1 // pred_check_branch
      %135 = sbr.rel (0) target = $region17
    $region16: #{tpu_custom_call.1} parent=1 // pred_region
      %136 = dma.done [#allocation3], 256
    $region17: #{tpu_custom_call.1} parent=1 // pred_fallthru
      _
    %137 = vsyncpa [#allocation3], 1

</llo_original>
